<compile_context>
chip_gen: v7x
topology: tpu7x:2x2x1
jax: 0.10.0
libtpu: 0.0.40
codegen_flags: <defaults>
</compile_context>

<pallas_src>
import functools
import math

import jax
import jax.numpy as jnp
from jax import lax
from jax.experimental import pallas as pl
from jax.experimental.pallas import tpu as pltpu

_MB = 1024 * 1024


def _round_up(x: int, m: int) -> int:
    return (x + m - 1) // m * m


# ------------------------- chip-dependent VMEM policy ------------------------


def _detect_vmem_capacity() -> int:
    try:
        return int(pltpu.get_tpu_info().vmem_capacity_bytes)
    except Exception:
        return 64 * _MB          # conservative fallback: v7x per-TC VMEM


_VMEM_CAP = _detect_vmem_capacity()
if _VMEM_CAP >= 96 * _MB:        # v5e / v6e: 128 MiB physical VMEM
    _DEFAULT_VMEM_BUDGET = 56 * _MB
    _VMEM_LIMIT_CAP = 96 * _MB
else:                            # v7x (64 MiB per TC) or unknown
    _DEFAULT_VMEM_BUDGET = 24 * _MB
    _VMEM_LIMIT_CAP = 48 * _MB

_HAS_BUFFERED = hasattr(pl, "Buffered")


# --------------------------- elementwise helpers -----------------------------


def _gelu_f32(x):
    # GPT-2 tanh GELU; x*x*x (not pow) so the VPU does two muls, tanh -> EUP.
    c = math.sqrt(2.0 / math.pi)
    return 0.5 * x * (1.0 + jnp.tanh(c * (x + 0.044715 * x * x * x)))


def _layer_norm(x, gamma, beta, eps=1e-5):
    x32 = x.astype(jnp.float32)
    mu = jnp.mean(x32, axis=-1, keepdims=True)
    var = jnp.mean(jnp.square(x32 - mu), axis=-1, keepdims=True)
    return (x32 - mu) * jax.lax.rsqrt(var + eps) * gamma + beta


# --------------------------- Pallas matmul kernels ----------------------------


def _make_matmul_kernel(multi_k, has_bias, activation):
    """Kernel body for Y = X @ W (+ b) with optional fused f32 epilogue."""

    def epilogue(y, o_ref):
        if activation is not None:
            y = activation(y)
        o_ref[...] = y.astype(o_ref.dtype)

    if multi_k:
        def kernel(x_ref, w_ref, *rest):
            if has_bias:
                b_ref, o_ref, acc_ref = rest
            else:
                o_ref, acc_ref = rest
            k = pl.program_id(2)

            @pl.when(k == 0)
            def _():
                if has_bias:
                    acc_ref[...] = jnp.broadcast_to(
                        b_ref[...].astype(jnp.float32), acc_ref.shape)
                else:
                    acc_ref[...] = jnp.zeros_like(acc_ref)

            acc_ref[...] += jnp.dot(x_ref[...], w_ref[...],
                                    preferred_element_type=jnp.float32)

            @pl.when(k == pl.num_programs(2) - 1)
            def _():
                epilogue(acc_ref[...], o_ref)
    else:
        # Single-K fast path: no scratch accumulator, no acc write-back.
        def kernel(x_ref, w_ref, *rest):
            if has_bias:
                b_ref, o_ref = rest
            else:
                (o_ref,) = rest
            y = jnp.dot(x_ref[...], w_ref[...],
                        preferred_element_type=jnp.float32)
            if has_bias:
                y = y + b_ref[...].astype(jnp.float32)
            epilogue(y, o_ref)

    return kernel


# ------------------------------ tiling policy ---------------------------------


def _largest_aligned_tile(dim, cap):
    """Largest multiple-of-128 tile <= cap that divides round_up(dim, 128)."""
    c = _round_up(dim, 128) // 128
    best = 1
    for d in range(1, min(c, cap // 128) + 1):
        if c % d == 0:
            best = d
    return 128 * best


def _pick_tiles(M, K, N, in_bytes, out_bytes, vmem_budget):
    """Returns (tm, tk, tn, weight_resident_single_buffer)."""
    Kp = _round_up(K, 128)
    Np = _round_up(N, 128)
    Mp8 = max(_round_up(M, 8), 8)

    # Weight-resident path: the whole padded W stays in VMEM (DMA'd once,
    # single-buffered via pl.Buffered(1)); only X / Y stream along the M axis.
    for tm in (512, 256, 128, 64, 32, 16, 8):
        tm_e = min(tm, Mp8)
        resident_need = ((Kp * Np) * in_bytes + 2 * Np * 4     # W once + bias
                         + 2 * tm_e * Kp * in_bytes            # X double-buffered
                         + 2 * tm_e * Np * out_bytes)          # Y double-buffered
        if resident_need <= vmem_budget:
            tn = Np
            if Mp8 <= tm_e and Np % 256 == 0:
                # Decode-shaped call (single M step): split N so megacore /
                # v7x's 2nd TensorCore gets a parallel grid step.
                tn = Np // 2
            return tm_e, Kp, tn, tn == Np

    # Streaming path: lane-dense, MXU-aligned tiles.  tm raised toward 1024 so
    # the big lm_head matmul leaves the HBM-bound regime on v6e; tn is the
    # largest aligned divisor of Np (no extra vocab padding).
    tn = _largest_aligned_tile(Np, 512)
    tk = _largest_aligned_tile(Kp, 2048)
    tm = min(1024, Mp8)

    def stream_need(tm_, tk_, tn_):
        return (2 * (tm_ * tk_ + tk_ * tn_) * in_bytes + 2 * tn_ * 4
                + 2 * tm_ * tn_ * out_bytes + tm_ * tn_ * 4)

    while stream_need(tm, tk, tn) > vmem_budget and tm > 128:
        tm = max(128, _round_up(tm // 2, 8))
    while stream_need(tm, tk, tn) > vmem_budget and tk > 256:
        tk = _largest_aligned_tile(Kp, tk // 2)
    return tm, tk, tn, False


def _pad2(a, rows, cols):
    r, c = a.shape
    if r == rows and c == cols:
        return a
    return jnp.pad(a, ((0, rows - r), (0, cols - c)))


# --------------------------- packed dense parameters --------------------------


@jax.tree_util.register_pytree_node_class
class DensePack:
    """Pre-cast (bf16) and pre-padded (128-aligned) dense-layer parameters."""

    def __init__(self, w, b, k, n):
        self.w = w            # (Kp, Np) compute dtype
        self.b = b            # (1, Np) float32, or None
        self.k = int(k)       # logical K (static)
        self.n = int(n)       # logical N (static)

    def tree_flatten(self):
        return (self.w, self.b), (self.k, self.n)

    @classmethod
    def tree_unflatten(cls, aux, children):
        return cls(children[0], children[1], aux[0], aux[1])


def pack_dense(weight, bias, *, compute_dtype=jnp.bfloat16):
    """Cast to bf16 and pad K/N to 128-aligned shapes ONCE (at load time)."""
    K, N = weight.shape
    Kp, Np = _round_up(K, 128), _round_up(N, 128)
    wp = _pad2(weight.astype(compute_dtype), Kp, Np)
    bp = None if bias is None else _pad2(
        bias.astype(jnp.float32).reshape(1, N), 1, Np)
    return DensePack(wp, bp, K, N)


# ------------------------------ matmul wrapper ---------------------------------


def _matmul_padded(x2, wp, bp, N, *, out_dtype, activation=None, tiles=None,
                   vmem_budget=None, compute_dtype=jnp.bfloat16,
                   interpret=False):
    """x2:(M,K) @ wp:(Kp,Np) (+ bp) -> (M,N).  wp/bp are already padded/cast."""
    M, K = x2.shape
    Kp, Np = wp.shape
    in_bytes = jnp.dtype(compute_dtype).itemsize
    out_bytes = jnp.dtype(out_dtype).itemsize
    budget = _DEFAULT_VMEM_BUDGET if vmem_budget is None else vmem_budget

    if tiles is None:
        tm, tk, tn, w_once = _pick_tiles(M, Kp, Np, in_bytes, out_bytes, budget)
    else:
        tm, tk, tn = tiles
        w_once = False
    w_once = w_once and _HAS_BUFFERED

    Mp = _round_up(max(M, 1), tm)
    Kp2 = _round_up(Kp, tk)       # no-op for auto-picked tiles
    Np2 = _round_up(Np, tn)

    xp = _pad2(x2.astype(compute_dtype), Mp, Kp2)
    wpad = _pad2(wp, Kp2, Np2)
    bpad = None if bp is None else _pad2(bp, 1, Np2)
    has_bias = bpad is not None
    nk = Kp2 // tk

    w_kw = {"pipeline_mode": pl.Buffered(1)} if w_once else {}
    if nk == 1:
        grid = (Mp // tm, Np2 // tn)
        in_specs = [pl.BlockSpec((tm, tk), lambda i, j: (i, 0)),
                    pl.BlockSpec((tk, tn), lambda i, j: (0, j), **w_kw)]
        if has_bias:
            in_specs.append(pl.BlockSpec((1, tn), lambda i, j: (0, j)))
        out_spec = pl.BlockSpec((tm, tn), lambda i, j: (i, j))
        scratch = []
        dims = ("parallel", "parallel")
    else:
        grid = (Mp // tm, Np2 // tn, nk)
        in_specs = [pl.BlockSpec((tm, tk), lambda i, j, k: (i, k)),
                    pl.BlockSpec((tk, tn), lambda i, j, k: (k, j), **w_kw)]
        if has_bias:
            in_specs.append(pl.BlockSpec((1, tn), lambda i, j, k: (0, j)))
        out_spec = pl.BlockSpec((tm, tn), lambda i, j, k: (i, j))
        scratch = [pltpu.VMEM((tm, tn), jnp.float32)]
        dims = ("parallel", "parallel", "arbitrary")

    w_mult = 1 if w_once else 2
    vmem_need = (2 * tm * tk * in_bytes + w_mult * tk * tn * in_bytes
                 + (2 * tn * 4 if has_bias else 0)
                 + 2 * tm * tn * out_bytes
                 + (tm * tn * 4 if nk > 1 else 0))
    vmem_limit = int(min(max(vmem_need + 8 * _MB, 32 * _MB), _VMEM_LIMIT_CAP))

    kernel = _make_matmul_kernel(nk > 1, has_bias, activation)
    inputs = [xp, wpad] + ([bpad] if has_bias else [])

    out = pl.pallas_call(
        kernel,
        out_shape=jax.ShapeDtypeStruct((Mp, Np2), out_dtype),
        grid_spec=pltpu.PrefetchScalarGridSpec(
            num_scalar_prefetch=0,
            grid=grid,
            in_specs=in_specs,
            out_specs=out_spec,
            scratch_shapes=scratch),
        compiler_params=pltpu.CompilerParams(
            dimension_semantics=dims,
            vmem_limit_bytes=vmem_limit),
        cost_estimate=pl.CostEstimate(
            flops=2 * M * K * N,
            transcendentals=0,
            bytes_accessed=(M * K + K * N) * in_bytes + M * N * out_bytes),
        interpret=interpret,
    )(*inputs)
    return out[:M, :N]


def addmm_pallas(x2, weight, bias, *, compute_dtype=jnp.bfloat16,
                 out_dtype=None, tiles=None, vmem_budget=None,
                 interpret=False):
    """y = x2 @ weight + bias (raw, un-packed weights; packs on the fly)."""
    pk = pack_dense(weight, bias, compute_dtype=compute_dtype)
    out_dtype = x2.dtype if out_dtype is None else out_dtype
    return _matmul_padded(x2, pk.w, pk.b, pk.n, out_dtype=out_dtype,
                          tiles=tiles, vmem_budget=vmem_budget,
                          compute_dtype=compute_dtype, interpret=interpret)


def conv1d_pallas(x, weight, bias, **kwargs):
    """GPT-2 Conv1D: affine map over the last axis of x (torch addmm semantics)."""
    *lead, nx = x.shape
    nf = weight.shape[1]
    y2 = addmm_pallas(x.reshape(-1, nx), weight, bias, **kwargs)
    return y2.reshape(*lead, nf)


def dense_pallas(x, pk: DensePack, *, activation=None, out_dtype=None,
                 interpret=False):
    """Dense layer using pre-packed (bf16, 128-padded) parameters."""
    *lead, K = x.shape
    assert K == pk.k, (K, pk.k)
    out_dtype = x.dtype if out_dtype is None else out_dtype
    y2 = _matmul_padded(x.reshape(-1, K), pk.w, pk.b, pk.n,
                        out_dtype=out_dtype, activation=activation,
                        interpret=interpret)
    return y2.reshape(*lead, pk.n)


# --------------------------- flash attention kernel ----------------------------


def _make_flash_kernel(scale):
    def kernel(q_ref, k_ref, v_ref, o_ref, m_sc, l_sc, acc_sc):
        kv = pl.program_id(2)

        @pl.when(kv == 0)
        def _():
            m_sc[...] = jnp.full(m_sc.shape, -jnp.inf, jnp.float32)
            l_sc[...] = jnp.zeros(l_sc.shape, jnp.float32)
            acc_sc[...] = jnp.zeros(acc_sc.shape, jnp.float32)

        s = jnp.einsum("bqd,bkd->bqk", q_ref[...], k_ref[...],
                       preferred_element_type=jnp.float32) * scale
        tq, tk = s.shape[1], s.shape[2]
        q_pos = pl.program_id(1) * tq + lax.broadcasted_iota(jnp.int32, (tq, tk), 0)
        k_pos = kv * tk + lax.broadcasted_iota(jnp.int32, (tq, tk), 1)
        # Same masking as the module: masked scores are REPLACED by -10000.0
        # (scores stay f32 inside the kernel, so -10000 is safe).
        s = jnp.where((q_pos >= k_pos)[None, :, :], s, jnp.float32(-10000.0))

        m_new = jnp.maximum(m_sc[...], s.max(axis=-1, keepdims=True))
        alpha = jnp.exp(m_sc[...] - m_new)
        p = jnp.exp(s - m_new)
        l_sc[...] = alpha * l_sc[...] + p.sum(axis=-1, keepdims=True)
        acc_sc[...] = alpha * acc_sc[...] + jnp.einsum(
            "bqk,bkd->bqd", p.astype(v_ref.dtype), v_ref[...],
            preferred_element_type=jnp.float32)
        m_sc[...] = m_new

        @pl.when(kv == pl.num_programs(2) - 1)
        def _():
            o_ref[...] = (acc_sc[...] *
                          pl.reciprocal(l_sc[...], approx=True)).astype(o_ref.dtype)

    return kernel


def _pick_attn_tiles(S):
    tq = S
    for t in (256, 128):
        if S % t == 0:
            tq = t
            break
    tk = S
    for t in (512, 256, 128):
        if S % t == 0:
            tk = t
            break
    return tq, tk


def flash_attention(q, k, v, *, interpret=False):
    """Causal online-softmax attention.  q, k, v: (B*H, S, head_dim)."""
    BH, S, D = q.shape
    tq, tk = _pick_attn_tiles(S)
    kernel = _make_flash_kernel(1.0 / math.sqrt(D))
    bytes_in = q.size * q.dtype.itemsize
    return pl.pallas_call(
        kernel,
        out_shape=jax.ShapeDtypeStruct((BH, S, D), q.dtype),
        grid_spec=pltpu.PrefetchScalarGridSpec(
            num_scalar_prefetch=0,
            grid=(BH, S // tq, S // tk),
            in_specs=[pl.BlockSpec((1, tq, D), lambda b, i, j: (b, i, 0)),
                      pl.BlockSpec((1, tk, D), lambda b, i, j: (b, j, 0)),
                      pl.BlockSpec((1, tk, D), lambda b, i, j: (b, j, 0))],
            out_specs=pl.BlockSpec((1, tq, D), lambda b, i, j: (b, i, 0)),
            scratch_shapes=[pltpu.VMEM((1, tq, 1), jnp.float32),
                            pltpu.VMEM((1, tq, 1), jnp.float32),
                            pltpu.VMEM((1, tq, D), jnp.float32)]),
        compiler_params=pltpu.CompilerParams(
            dimension_semantics=("parallel", "parallel", "arbitrary")),
        cost_estimate=pl.CostEstimate(
            flops=4 * BH * S * S * D,
            transcendentals=BH * S * S,
            bytes_accessed=4 * bytes_in),
        interpret=interpret,
    )(q, k, v)


# ------------------------------ GPT-2 forward ----------------------------------


def _attention_pallas(x, p, n_head, dense, flash):
    B, S, C = x.shape
    hd = C // n_head
    qkv = dense(x, p["c_attn"])                               # (B, S, 3C) bf16
    q, k, v = jnp.split(qkv, 3, axis=-1)

    def heads(t):                                             # (B*H, S, hd)
        return t.reshape(B, S, n_head, hd).transpose(0, 2, 1, 3).reshape(
            B * n_head, S, hd)

    a = flash(heads(q), heads(k), heads(v))
    a = a.reshape(B, n_head, S, hd).transpose(0, 2, 1, 3).reshape(B, S, C)
    return dense(a, p["c_proj"])


def _block_pallas(x, p, n_head, dense, flash):
    h = x + _attention_pallas(_layer_norm(x, p["ln1_g"], p["ln1_b"]),
                              p, n_head, dense, flash)
    # GELU fused into the fc matmul epilogue (saves a full HBM pass over (M,4C)).
    m = dense(_layer_norm(h, p["ln2_g"], p["ln2_b"]), p["fc"],
              activation=_gelu_f32)
    m = dense(m, p["proj"])
    return h + m


def gpt2_lm_forward_pallas(params, tokens, n_head):
    S = tokens.shape[1]
    h = (params["wte"][tokens] + params["wpe"][:S][None, :, :]).astype(jnp.bfloat16)
    dense = functools.partial(dense_pallas, out_dtype=jnp.bfloat16)
    for p in params["blocks"]:
        h = _block_pallas(h, p, n_head, dense, flash_attention)
    h = _layer_norm(h, params["lnf_g"], params["lnf_b"])
    # lm_head: nn.Linear(bias=False) -> no-bias kernel variant, f32 logits.
    return dense_pallas(h, params["lm_head"], out_dtype=jnp.float32)


# ------------------------------- reference path --------------------------------


def _conv1d_ref(x, w, b):
    *lead, nx = x.shape
    y = x.reshape(-1, nx) @ w
    if b is not None:
        y = y + b
    return y.reshape(*lead, w.shape[1])


def _attention_ref(x, p, n_head):
    B, S, C = x.shape
    hd = C // n_head
    qkv = _conv1d_ref(x, p["c_attn_w"], p["c_attn_b"])
    q, k, v = jnp.split(qkv, 3, axis=-1)

    def heads(t):
        return t.reshape(B, S, n_head, hd).transpose(0, 2, 1, 3)

    q, k, v = heads(q), heads(k), heads(v)
    w = jnp.einsum("bhqd,bhkd->bhqk", q, k) / math.sqrt(hd)
    mask = jnp.tril(jnp.ones((S, S), dtype=bool))
    w = jnp.where(mask, w, jnp.float32(-10000.0))
    w = jax.nn.softmax(w, axis=-1)
    a = jnp.einsum("bhqk,bhkd->bhqd", w, v).transpose(0, 2, 1, 3).reshape(B, S, C)
    return _conv1d_ref(a, p["c_proj_w"], p["c_proj_b"])


def _block_ref(x, p, n_head):
    h = x + _attention_ref(_layer_norm(x, p["ln1_g"], p["ln1_b"]), p, n_head)
    m = _conv1d_ref(_layer_norm(h, p["ln2_g"], p["ln2_b"]), p["fc_w"], p["fc_b"])
    m = _conv1d_ref(_gelu_f32(m), p["proj_w"], p["proj_b"])
    return h + m


def gpt2_lm_forward_ref(raw, tokens, n_head):
    h = raw["wte"][tokens] + raw["wpe"][: tokens.shape[1]][None, :, :]
    for p in raw["blocks"]:
        h = _block_ref(h, p, n_head)
    h = _layer_norm(h, raw["lnf_g"], raw["lnf_b"])
    return _conv1d_ref(h, raw["lm_head_w"], None)


# ------------------------------- parameters ------------------------------------


def init_gpt2_params(key, embed_dim, n_layer, n_pos, vocab, std=0.02):
    ks = list(jax.random.split(key, 3 + 4 * n_layer))

    def normal(shape):
        return (std * jax.random.normal(ks.pop(), shape)).astype(jnp.float32)

    zeros = lambda n: jnp.zeros((n,), jnp.float32)
    ones = lambda n: jnp.ones((n,), jnp.float32)

    params = {
        "wte": normal((vocab, embed_dim)),
        "wpe": normal((n_pos, embed_dim)),
        "lnf_g": ones(embed_dim), "lnf_b": zeros(embed_dim),
        "lm_head_w": normal((embed_dim, vocab)),   # nn.Linear(bias=False)
        "blocks": [],
    }
    for _ in range(n_layer):
        params["blocks"].append({
            "ln1_g": ones(embed_dim), "ln1_b": zeros(embed_dim),
            "ln2_g": ones(embed_dim), "ln2_b": zeros(embed_dim),
            "c_attn_w": normal((embed_dim, 3 * embed_dim)),
            "c_attn_b": zeros(3 * embed_dim),
            "c_proj_w": normal((embed_dim, embed_dim)),
            "c_proj_b": zeros(embed_dim),
            "fc_w": normal((embed_dim, 4 * embed_dim)),
            "fc_b": zeros(4 * embed_dim),
            "proj_w": normal((4 * embed_dim, embed_dim)),
            "proj_b": zeros(embed_dim),
        })
    return params


def prepare_gpt2_params(raw):
    """One-time bf16 cast + 128-alignment padding of all dense weights/biases."""
    packed = {
        "wte": raw["wte"], "wpe": raw["wpe"],
        "lnf_g": raw["lnf_g"], "lnf_b": raw["lnf_b"],
        "lm_head": pack_dense(raw["lm_head_w"], None),
        "blocks": [],
    }
    for p in raw["blocks"]:
        packed["blocks"].append({
            "ln1_g": p["ln1_g"], "ln1_b": p["ln1_b"],
            "ln2_g": p["ln2_g"], "ln2_b": p["ln2_b"],
            "c_attn": pack_dense(p["c_attn_w"], p["c_attn_b"]),
            "c_proj": pack_dense(p["c_proj_w"], p["c_proj_b"]),
            "fc": pack_dense(p["fc_w"], p["fc_b"]),
            "proj": pack_dense(p["proj_w"], p["proj_b"]),
        })
    return packed


# ----------------------------------- main --------------------------------------


if __name__ == "__main__":
    root = jax.random.PRNGKey(0)
    (k_params, k_x, k_w, k_b, k_x2, k_w2, k_b2,
     k_q, k_k, k_v, k_tok) = jax.random.split(root, 11)

    # 1) standalone Conv1D (addmm) kernel: weight-resident / single-K fast path.
    batch, seq, nx, nf = 2, 8, 32, 64
    x = jax.random.normal(k_x, (batch, seq, nx), jnp.float32)
    w = (0.02 * jax.random.normal(k_w, (nx, nf))).astype(jnp.float32)
    b = (0.02 * jax.random.normal(k_b, (nf,))).astype(jnp.float32)
    y = jax.block_until_ready(conv1d_pallas(x, w, b))
    y_ref = _conv1d_ref(x, w, b)
    assert y.shape == (batch, seq, nf)
    assert jnp.allclose(y, y_ref, atol=2e-2, rtol=2e-2), float(
        jnp.max(jnp.abs(y - y_ref)))

    # 2) streaming/tiled path: explicit tiles, multi-step K reduction,
    #    non-tile-divisible M/N (exercises padding + output slicing).
    M2, K2, N2 = 48, 384, 200
    x2 = jax.random.normal(k_x2, (M2, K2), jnp.float32)
    w2 = (0.02 * jax.random.normal(k_w2, (K2, N2))).astype(jnp.float32)
    b2 = (0.02 * jax.random.normal(k_b2, (N2,))).astype(jnp.float32)
    y2 = jax.block_until_ready(
        addmm_pallas(x2, w2, b2, tiles=(16, 128, 128)))   # grid = (3, 2, 3)
    y2_ref = x2 @ w2 + b2
    assert jnp.allclose(y2, y2_ref, atol=2e-2, rtol=2e-2), float(
        jnp.max(jnp.abs(y2 - y2_ref)))

    # 3) standalone causal flash-attention kernel vs. softmax reference.
    BH, S, D = 4, 8, 8
    q = jax.random.normal(k_q, (BH, S, D), jnp.float32).astype(jnp.bfloat16)
    kk = jax.random.normal(k_k, (BH, S, D), jnp.float32).astype(jnp.bfloat16)
    v = jax.random.normal(k_v, (BH, S, D), jnp.float32).astype(jnp.bfloat16)
    o = jax.block_until_ready(flash_attention(q, kk, v))
    qf, kf, vf = (t.astype(jnp.float32) for t in (q, kk, v))
    s_ref = jnp.einsum("bqd,bkd->bqk", qf, kf) / math.sqrt(D)
    mask = jnp.tril(jnp.ones((S, S), dtype=bool))
    s_ref = jnp.where(mask[None], s_ref, jnp.float32(-10000.0))
    o_ref = jnp.einsum("bqk,bkd->bqd", jax.nn.softmax(s_ref, axis=-1), vf)
    assert jnp.allclose(o.astype(jnp.float32), o_ref, atol=2e-2, rtol=2e-2), float(
        jnp.max(jnp.abs(o.astype(jnp.float32) - o_ref)))

    # 4) tiny GPT2LM forward: all dense layers + attention through Pallas.
    embed_dim, n_head, n_layer, n_pos, vocab = 32, 4, 2, 16, 97
    raw = init_gpt2_params(k_params, embed_dim, n_layer, n_pos, vocab)
    packed = prepare_gpt2_params(raw)          # bf16 cast + 128-pad ONCE
    tokens = jax.random.randint(k_tok, (2, 8), 0, vocab)

    fwd = jax.jit(functools.partial(gpt2_lm_forward_pallas, n_head=n_head))
    logits = jax.block_until_ready(fwd(packed, tokens))
    logits_ref = gpt2_lm_forward_ref(raw, tokens, n_head)

    assert logits.shape == (2, 8, vocab)
    assert bool(jnp.all(jnp.isfinite(logits)))
    assert jnp.allclose(logits, logits_ref, atol=5e-2, rtol=5e-2), float(
        jnp.max(jnp.abs(logits - logits_ref)))

    print("KERNEL_OK")
</pallas_src>

<mosaic_0001>
module attributes {stable_mosaic.version = 11 : i64} {
  func.func @kernel(%arg0: i32, %arg1: i32, %arg2: memref<16x128xbf16, #tpu.memory_space<vmem>>, %arg3: memref<128x128xbf16, #tpu.memory_space<vmem>>, %arg4: memref<1x128xf32, #tpu.memory_space<vmem>>, %arg5: memref<16x128xf32, #tpu.memory_space<vmem>>) attributes {dimension_semantics = [#tpu.dimension_semantics<parallel>, #tpu.dimension_semantics<parallel>], iteration_bounds = array<i64: 1, 1>, scalar_prefetch = 0 : i64, scratch_operands = 0 : i64, tpu.core_type = #tpu.core_type<tc>, window_params = [{transform_indices = @transform_0, window_bounds = array<i64: 16, 128>}, {pipeline_mode = #tpu.pipeline_mode<synchronous>, transform_indices = @transform_1, window_bounds = array<i64: 128, 128>}, {transform_indices = @transform_2, window_bounds = array<i64: 1, 128>}, {transform_indices = @transform_3, window_bounds = array<i64: 16, 128>}]} {
    %c0 = arith.constant 0 : index
    %c0_0 = arith.constant 0 : index
    %0 = vector.load %arg2[%c0, %c0_0] : memref<16x128xbf16, #tpu.memory_space<vmem>>, vector<16x128xbf16>
    %c0_1 = arith.constant 0 : index
    %c0_2 = arith.constant 0 : index
    %1 = vector.load %arg3[%c0_1, %c0_2] : memref<128x128xbf16, #tpu.memory_space<vmem>>, vector<128x128xbf16>
    %cst = arith.constant dense<0.000000e+00> : vector<16x128xf32>
    %2 = tpu.matmul %0, %1, %cst {dimension_numbers = #tpu.dot_dimension_numbers<[1], [0], [0], [1], [0, 0, 1, 1], [], []>} : vector<16x128xbf16>, vector<128x128xbf16>, vector<16x128xf32> -> vector<16x128xf32>
    %c0_3 = arith.constant 0 : index
    %c0_4 = arith.constant 0 : index
    %3 = vector.load %arg4[%c0_3, %c0_4] : memref<1x128xf32, #tpu.memory_space<vmem>>, vector<1x128xf32>
    %4 = vector.broadcast %3 : vector<1x128xf32> to vector<16x128xf32>
    %5 = arith.addf %2, %4 : vector<16x128xf32>
    %c0_5 = arith.constant 0 : index
    %c0_6 = arith.constant 0 : index
    %6 = vector.load %arg5[%c0_5, %c0_6] : memref<16x128xf32, #tpu.memory_space<vmem>>, vector<16x128xf32>
    tpu.vector_store %arg5[%c0_5, %c0_6], %5 {strides = array<i32>} : memref<16x128xf32, #tpu.memory_space<vmem>>, vector<16x128xf32>,
    return
  }
  func.func @transform_0(%arg0: i32, %arg1: i32) -> (i32, i32) {
    %c0_i32 = arith.constant 0 : i32
    %c0_i32_0 = arith.constant 0 : i32
    return %arg0, %c0_i32 : i32, i32
  }
  func.func @transform_1(%arg0: i32, %arg1: i32) -> (i32, i32) {
    %c0_i32 = arith.constant 0 : i32
    %c0_i32_0 = arith.constant 0 : i32
    return %c0_i32, %arg1 : i32, i32
  }
  func.func @transform_2(%arg0: i32, %arg1: i32) -> (i32, i32) {
    %c0_i32 = arith.constant 0 : i32
    %c0_i32_0 = arith.constant 0 : i32
    return %c0_i32, %arg1 : i32, i32
  }
  func.func @transform_3(%arg0: i32, %arg1: i32) -> (i32, i32) {
    %c0_i32 = arith.constant 0 : i32
    return %arg0, %arg1 : i32, i32
  }
}

</mosaic_0001>

<llo_original>
// kernel: tpu_custom_call.1
$region0: #{tpu_custom_call.1}
  #allocation0 [shape = 'u32[]', space=smem, size = 0x4, offset = 0x4, fixed_abs, tag = 'smem constant byte address 0x4 - core index']
  #allocation1 [shape = 'u32[144,128]{1,0:T(1,128)}', space=vmem, size = 0x12000, scoped, tag = 'internal scratch']
  %s0 = inlined_call_operand.hbm [shape: bf16[16,128], index: 0, kind: input, shape index: {}]
  %s1 = inlined_call_operand.hbm [shape: bf16[128,128], index: 1, kind: input, shape index: {}]
  %s2 = inlined_call_operand.vmem [shape: f32[1,128], index: 2, kind: input, shape index: {}]
  %s3 = inlined_call_operand.hbm [shape: f32[16,128], index: 3, kind: output, shape index: {}]
  %s4 = sld [smem:[#allocation0]]
  $region30: #{tpu_custom_call.1} parent=0
    _
  %s6 = ssub.s32 1, %s4
  %s7 = scalar_select 0, %s6, %s4
  $region1: #{tpu_custom_call.1} parent=0
    #allocation2 [shape = 'u8[4096]{0}', space=vmem, size = 0x1000, scoped, tag = 'input window, operand 0, single buffered']
    #allocation3 [shape = 's32[1]{0}', space=sflag, size = 0x4, scoped, tag = 'scoped memory for tpu_custom_call.1']
    #allocation4 [shape = 's32[1]{0}', space=sflag, size = 0x4, scoped, tag = 'scoped memory for tpu_custom_call.1']
    #allocation5 [shape = 'u8[32768]{0}', space=vmem, size = 0x8000, scoped, tag = 'input window, operand 1, single buffered']
    #allocation6 [shape = 's32[1]{0}', space=sflag, size = 0x4, scoped, tag = 'scoped memory for tpu_custom_call.1']
    #allocation7 [shape = 'u8[8192]{0}', space=vmem, size = 0x2000, scoped, tag = 'output window, operand 0, single buffered']
    %8 = vsyncpa [#allocation3], 0
    %9 = vsyncpa [#allocation6], 0
    %10 = vsyncpa [#allocation4], 0
    // Predicated region
    $region2: #{tpu_custom_call.1} parent=1 // pred_check
      _
    $region3: #{tpu_custom_call.1} parent=1 // pred_check_branch
      %12 = sbr.rel (0) target = $region5
    $region4: #{tpu_custom_call.1} parent=1 // pred_region
      %s14 = ssub.s32 128, 128
      %15 = vsyncadd [#allocation3], %s14
      %s16 = sshll.u32 [#allocation2], 4
      %s17 = int_to_ptr.vmem [resolvable:$true] %s16
      %22 = dma.hbm_to_vmem [thread:$0]  %s0, 128, %s17, [#allocation3], 64, 64, 4
    $region5: #{tpu_custom_call.1} parent=1 // pred_fallthru
      _
    // Predicated region
    $region6: #{tpu_custom_call.1} parent=1 // pred_check
      _
    $region7: #{tpu_custom_call.1} parent=1 // pred_check_branch
      %24 = sbr.rel (0) target = $region9
    $region8: #{tpu_custom_call.1} parent=1 // pred_region
      %s26 = ssub.s32 1024, 1024
      %27 = vsyncadd [#allocation6], %s26
      %s28 = sshll.u32 [#allocation5], 4
      %s29 = int_to_ptr.vmem [resolvable:$true] %s28
      %34 = dma.hbm_to_vmem [thread:$0]  %s1, 1024, %s29, [#allocation6], 64, 64, 4
    $region9: #{tpu_custom_call.1} parent=1 // pred_fallthru
      _
    // Predicated region
    $region10: #{tpu_custom_call.1} parent=1 // pred_check
      _
    $region11: #{tpu_custom_call.1} parent=1 // pred_check_branch
      %36 = sbr.rel (0) target = $region13
    $region12: #{tpu_custom_call.1} parent=1 // pred_region
      _
    $region13: #{tpu_custom_call.1} parent=1 // pred_fallthru
      _
    // Predicated region
    $region14: #{tpu_custom_call.1} parent=1 // pred_check
      _
    $region15: #{tpu_custom_call.1} parent=1 // pred_check_branch
      %38 = sbr.rel (0) target = $region17
    $region16: #{tpu_custom_call.1} parent=1 // pred_region
      %39 = dma.done [#allocation3], 128
    $region17: #{tpu_custom_call.1} parent=1 // pred_fallthru
      _
    // Predicated region
    $region18: #{tpu_custom_call.1} parent=1 // pred_check
      _
    $region19: #{tpu_custom_call.1} parent=1 // pred_check_branch
      %41 = sbr.rel (0) target = $region21
    $region20: #{tpu_custom_call.1} parent=1 // pred_region
      %42 = dma.done [#allocation6], 1024
    $region21: #{tpu_custom_call.1} parent=1 // pred_fallthru
      _
    %v44 = vld [vmem:[#allocation2] sm:$0xf]
    %v45 = vld [vmem:[#allocation2 + $0x4] sm:$0xf]
    %v46 = vld [vmem:[#allocation5] sm:$0xf]
    %v47 = vld [vmem:[#allocation5 + $0x4] sm:$0xf]
    %v48 = vld [vmem:[#allocation5 + $0x8] sm:$0xf]
    %v49 = vld [vmem:[#allocation5 + $0xc] sm:$0xf]
    %v50 = vld [vmem:[#allocation5 + $0x10] sm:$0xf]
    %v51 = vld [vmem:[#allocation5 + $0x14] sm:$0xf]
    %v52 = vld [vmem:[#allocation5 + $0x18] sm:$0xf]
    %v53 = vld [vmem:[#allocation5 + $0x1c] sm:$0xf]
    %v54 = vld [vmem:[#allocation5 + $0x20] sm:$0xf]
    %v55 = vld [vmem:[#allocation5 + $0x24] sm:$0xf]
    %v56 = vld [vmem:[#allocation5 + $0x28] sm:$0xf]
    %v57 = vld [vmem:[#allocation5 + $0x2c] sm:$0xf]
    %v58 = vld [vmem:[#allocation5 + $0x30] sm:$0xf]
    %v59 = vld [vmem:[#allocation5 + $0x34] sm:$0xf]
    %v60 = vld [vmem:[#allocation5 + $0x38] sm:$0xf]
    %v61 = vld [vmem:[#allocation5 + $0x3c] sm:$0xf]
    %v62 = vld [vmem:[%s2] sm:$0x1]
    %v64 = vlaneseq
    %v65 = vshrl.u32 %v64, 7
    %v66 = vsub.s32 0, %v65
    %v67 = vrot.slane %v62, %v66
    %v71 = vunpack.c.l.b16 %v44
    %v72 = vunpack.c.l.b16 %v45
    %v73 = vpack.c.b16 %v72, %v71
    %v91 = vunpack.c.l.b16 %v46
    %v92 = vunpack.c.l.b16 %v47
    %v93 = vunpack.c.l.b16 %v48
    %v94 = vunpack.c.l.b16 %v49
    %v95 = vunpack.c.l.b16 %v50
    %v96 = vunpack.c.l.b16 %v51
    %v97 = vunpack.c.l.b16 %v52
    %v98 = vunpack.c.l.b16 %v53
    %v99 = vunpack.c.l.b16 %v54
    %v100 = vunpack.c.l.b16 %v55
    %v101 = vunpack.c.l.b16 %v56
    %v102 = vunpack.c.l.b16 %v57
    %v103 = vunpack.c.l.b16 %v58
    %v104 = vunpack.c.l.b16 %v59
    %v105 = vunpack.c.l.b16 %v60
    %v106 = vunpack.c.l.b16 %v61
    %v107 = vpack.c.b16 %v92, %v91
    %v108 = vpack.c.b16 %v94, %v93
    %v109 = vpack.c.b16 %v96, %v95
    %v110 = vpack.c.b16 %v98, %v97
    %v111 = vpack.c.b16 %v100, %v99
    %v112 = vpack.c.b16 %v102, %v101
    %v113 = vpack.c.b16 %v104, %v103
    %v114 = vpack.c.b16 %v106, %v105
    %123 = vmatprep.subr.bf16.mxu0 0
    %124 = vmatpush1.bf16.msra.mxu0 %v107
    %125 = vmatprep.subr.bf16.mxu0 0
    %126 = vmatpush1.bf16.msra.mxu0 %v108
    %127 = vmatprep.subr.bf16.mxu0 0
    %128 = vmatpush1.bf16.msra.mxu0 %v109
    %129 = vmatprep.subr.bf16.mxu0 0
    %130 = vmatpush1.bf16.msra.mxu0 %v110
    %131 = vmatprep.subr.bf16.mxu0 0
    %132 = vmatpush1.bf16.msra.mxu0 %v111
    %133 = vmatprep.subr.bf16.mxu0 0
    %134 = vmatpush1.bf16.msra.mxu0 %v112
    %135 = vmatprep.subr.bf16.mxu0 0
    %136 = vmatpush1.bf16.msra.mxu0 %v113
    %137 = vmatprep.subr.bf16.mxu0 0
    %138 = vmatpush1.bf16.msra.mxu0 %v114
    %139 = vmatprep.subr.bf16.mxu0 0
    %140 = vmatpush1.bf16.msra.mxu0 0
    %141 = vmatprep.subr.bf16.mxu0 0
    %142 = vmatpush1.bf16.msra.mxu0 0
    %143 = vmatprep.subr.bf16.mxu0 0
    %144 = vmatpush1.bf16.msra.mxu0 0
    %145 = vmatprep.subr.bf16.mxu0 0
    %146 = vmatpush1.bf16.msra.mxu0 0
    %147 = vmatprep.subr.bf16.mxu0 0
    %148 = vmatpush1.bf16.msra.mxu0 0
    %149 = vmatprep.subr.bf16.mxu0 0
    %150 = vmatpush1.bf16.msra.mxu0 0
    %151 = vmatprep.subr.bf16.mxu0 0
    %152 = vmatpush1.bf16.msra.mxu0 0
    %153 = vmatprep.subr.bf16.mxu0 0
    %154 = vmatpush1.bf16.msra.mxu0 0
    %155 = vmatprep.mubr.bf16.mxu0 0
    %156 = vmatmul.mubr.bf16.gmra.mrb[0].mxu0 %v73
    %v157 = vpop.f32.mrb[0].mxu0
    %v158 = vadd.f32 %v67, %v157
    %v159 = vpop.f32.mrb[0].mxu0
    %v160 = vpop.f32.mrb[0].mxu0
    %v161 = vadd.f32 %v67, %v160
    %v162 = vpop.f32.mrb[0].mxu0
    %163 = vdwg.mxu0
    %164 = vst [vmem:[#allocation7] sm:$0xff] %v158
    %165 = vst [vmem:[#allocation7 + $0x8] sm:$0xff] %v161
    // Predicated region
    $region22: #{tpu_custom_call.1} parent=1 // pred_check
      _
    $region23: #{tpu_custom_call.1} parent=1 // pred_check_branch
      %167 = sbr.rel (0) target = $region25
    $region24: #{tpu_custom_call.1} parent=1 // pred_region
      %s169 = ssub.s32 256, 256
      %170 = vsyncadd [#allocation4], %s169
      %s171 = sshll.u32 [#allocation7], 4
      %s172 = int_to_ptr.vmem [resolvable:$true] %s171
      %177 = dma.vmem_to_hbm [thread:$0]  %s172, 256, %s3, [#allocation4], 128, 128, 8
    $region25: #{tpu_custom_call.1} parent=1 // pred_fallthru
      _
    // Predicated region
    $region26: #{tpu_custom_call.1} parent=1 // pred_check
      _
    $region27: #{tpu_custom_call.1} parent=1 // pred_check_branch
      %179 = sbr.rel (0) target = $region29
    $region28: #{tpu_custom_call.1} parent=1 // pred_region
      %180 = dma.done [#allocation4], 256
    $region29: #{tpu_custom_call.1} parent=1 // pred_fallthru
      _
    %181 = vsyncpa [#allocation3], 1
    %182 = vsyncpa [#allocation6], 1
    %183 = vsyncpa [#allocation4], 1

</llo_original>
